<compile_context>
chip_gen: v6e
topology: v6e:2x2x1
jax: 0.10.0
libtpu: 0.0.40
codegen_flags: <defaults>
</compile_context>

<pallas_src>
import functools

import jax
import jax.numpy as jnp
import numpy as np
from jax import lax
from jax.experimental import pallas as pl
from jax.experimental.pallas import tpu as pltpu

NUM_CLASSES = 5
V = 5 + NUM_CLASSES            # [conf, tx, ty, tw, th, cls0..cls4]
N_ANCHORS = 3
C_OUT = N_ANCHORS * V          # 30 head channels
N_FIELDS = 8                   # [n, cond, cx, cy, w, h, cls, keep]
N_CONST = 13                   # per-tile scalar constants (see kernel docstring)
TILE = 512                     # lane (cell) tile width
EXP_CLAMP = 30.0
SCALES = ((13, 32), (26, 16), (52, 8))   # (anchor-dict key, stride)


# ----------------------------- Pallas kernel --------------------------------

def fused_head_decode_kernel(x_ref, w_ref, b_ref, c_ref, out_ref, *, thresh):
    """One tile of grid cells (cells on the 128-lane axis, fields on sublanes).

    x_ref  : (Cin, tile)      backbone features for this tile
    w_ref  : (1, C_OUT, Cin)  this tile's 1x1-conv weight, field-major rows
    b_ref  : (1, C_OUT, 1)    this tile's 1x1-conv bias,   field-major rows
    c_ref  : (1, N_CONST, 1)  per-tile constants:
                              [aw0,aw1,aw2, ah0,ah1,ah2, stride,
                               hw, 1/hw, ws, 1/ws, local_base, m_valid]
    out_ref: (24, tile)       field-major rows, anchor inner:
                              [n*3, cond*3, cx*3, cy*3, w*3, h*3, cls*3, keep*3]
    """
    x = x_ref[...]                                   # (Cin, tile)
    cin = x.shape[0]
    tile = x.shape[1]
    wt = w_ref[0]                                    # (C_OUT, Cin)
    bias = b_ref[0]                                  # (C_OUT, 1)
    c = c_ref[0]                                     # (N_CONST, 1)
    anc = c[0:6, :]                                  # (6, 1)  [aw0..2, ah0..2]
    stride = c[6:7, :]
    hw = c[7:8, :]
    inv_hw = c[8:9, :]
    ws_f = c[9:10, :]
    inv_ws = c[10:11, :]
    local_base = c[11:12, :]
    m_valid = c[12:13, :]

    # ---- 1x1-conv head: K=Cin broadcast-FMAs on the VPU (Cin=3 here) -------
    # TODO(synk): with a real Darknet53 head (Cin=512/1024) switch to a bf16
    # MXU matmul (jnp.dot, f32 accumulation, K as an "arbitrary" grid axis).
    head = bias + wt[:, 0:1] * x[0:1, :]             # (C_OUT, tile), field-major
    for k in range(1, cin):
        head = head + wt[:, k:k + 1] * x[k:k + 1, :]

    # ---- per-cell n / h / w indices + ragged-tail mask ---------------------
    # f32 index math is exact while the flat cell index stays below 2^24,
    # far above these sizes; the +0.5 nudge keeps floor() robust at multiples.
    r = local_base + lax.broadcasted_iota(jnp.int32, (1, tile), 1).astype(jnp.float32)
    n_f = jnp.floor((r + 0.5) * inv_hw)
    rem = r - n_f * hw
    h_f = jnp.floor((rem + 0.5) * inv_ws)
    w_f = rem - h_f * ws_f
    valid = r < m_valid                              # (1, tile)

    # ---- slab decode: all 3 anchors at once ---------------------------------
    sig = jax.nn.sigmoid(head[0:9, :])               # conf*3, tx*3, ty*3
    cond = sig[0:3, :]
    cx = (w_f + sig[3:6, :]) * stride
    cy = (h_f + sig[6:9, :]) * stride
    # clamp keeps anchor*exp(t) finite for arbitrary heads (torch is unclamped)
    wh = anc * jnp.exp(jnp.minimum(head[9:15, :], EXP_CLAMP))   # (6, tile): w*3, h*3

    # argmax over classes (first max on ties, matching torch.argmax)
    best_val = head[15:18, :]
    best_idx = jnp.zeros((N_ANCHORS, tile), jnp.float32)
    for cc in range(1, NUM_CLASSES):
        val = head[15 + 3 * cc: 18 + 3 * cc, :]
        better = val > best_val
        best_val = jnp.where(better, val, best_val)
        best_idx = jnp.where(better, jnp.float32(cc), best_idx)

    keep = ((cond > thresh) & valid).astype(jnp.float32)   # strict '>' as in torch
    n3 = jnp.broadcast_to(n_f, (N_ANCHORS, tile))

    # single coalesced lane-dense store (no masked single-sublane writes)
    out_ref[...] = jnp.concatenate([n3, cond, cx, cy, wh, best_idx, keep], axis=0)


# ------------------------------ wrappers -------------------------------------

def _scale_layout(n, h, w, tile=TILE):
    """Column layout of the merged kernel output: per scale (key, col0, m)."""
    layout, col = [], 0
    for key, stride in SCALES:
        hs, ws = h // stride, w // stride
        m = n * hs * ws
        m_pad = pl.cdiv(m, tile) * tile
        layout.append((key, col, m))
        col += m_pad
    return layout, col


def detector_forward(image_nchw, params, *, thresh, anchors, tile=TILE):
    """Stand-in for Detector.forward: returns a (24, M_total) lane-dense slab;
    host numpy does the (rows, 8) permutation + keep compaction + NMS."""
    n_im, cin, h_im, w_im = image_nchw.shape

    # Hierarchical avg-pool backbone stand-in: read the image once (stride 8),
    # derive coarser scales by 2x2 means.      # TODO(synk): Darknet53 body
    h8, w8 = h_im // 8, w_im // 8
    p8 = image_nchw.reshape(n_im, cin, h8, 8, w8, 8).mean(axis=(3, 5))
    p16 = p8.reshape(n_im, cin, h8 // 2, 2, w8 // 2, 2).mean(axis=(3, 5))
    p32 = p16.reshape(n_im, cin, h8 // 4, 2, w8 // 4, 2).mean(axis=(3, 5))
    pooled = {8: p8, 16: p16, 32: p32}

    x_blocks, w_rows, b_rows, c_rows = [], [], [], []
    for key, stride in SCALES:
        hs, ws = h_im // stride, w_im // stride
        m = n_im * hs * ws
        n_tiles = pl.cdiv(m, tile)
        m_pad = n_tiles * tile

        # NCHW -> (Cin, M): cells ordered (n, h, w) row-major on the lane axis.
        x_t = jnp.transpose(pooled[stride], (1, 0, 2, 3)).reshape(cin, m)
        x_blocks.append(jnp.pad(x_t, ((0, 0), (0, m_pad - m))))

        # 1x1-conv params; rows permuted anchor-major -> field-major
        # (original channel c = a*V + f  ->  row j = f*3 + a).
        wt = jnp.asarray(params[key]["w"], jnp.float32).T            # (C_OUT, Cin)
        wt = wt.reshape(N_ANCHORS, V, cin).transpose(1, 0, 2).reshape(C_OUT, cin)
        bb = jnp.asarray(params[key]["b"], jnp.float32)
        bb = bb.reshape(N_ANCHORS, V).T.reshape(C_OUT, 1)

        anc = anchors[key]
        for t in range(n_tiles):
            w_rows.append(wt)
            b_rows.append(bb)
            c_rows.append(jnp.array(
                [anc[0][0], anc[1][0], anc[2][0],           # anchor widths
                 anc[0][1], anc[1][1], anc[2][1],           # anchor heights
                 float(stride),
                 float(hs * ws), 1.0 / float(hs * ws),
                 float(ws), 1.0 / float(ws),
                 float(t * tile),                            # scale-local tile base
                 float(m)],                                  # valid cells this scale
                jnp.float32).reshape(N_CONST, 1))

    x_all = jnp.concatenate(x_blocks, axis=1)                 # (Cin, M_total)
    w_all = jnp.stack(w_rows)                                 # (T, C_OUT, Cin)
    b_all = jnp.stack(b_rows)                                 # (T, C_OUT, 1)
    c_all = jnp.stack(c_rows)                                 # (T, N_CONST, 1)
    num_tiles = w_all.shape[0]
    m_total = x_all.shape[1]

    return pl.pallas_call(
        functools.partial(fused_head_decode_kernel, thresh=float(thresh)),
        out_shape=jax.ShapeDtypeStruct((N_FIELDS * N_ANCHORS, m_total), jnp.float32),
        grid=(num_tiles,),
        in_specs=[
            pl.BlockSpec((cin, tile), lambda i: (0, i)),
            pl.BlockSpec((1, C_OUT, cin), lambda i: (i, 0, 0)),
            pl.BlockSpec((1, C_OUT, 1), lambda i: (i, 0, 0)),
            pl.BlockSpec((1, N_CONST, 1), lambda i: (i, 0, 0)),
        ],
        out_specs=pl.BlockSpec((N_FIELDS * N_ANCHORS, tile), lambda i: (0, i)),
        compiler_params=pltpu.CompilerParams(dimension_semantics=("parallel",)),
    )(x_all, w_all, b_all, c_all)


# --------------------------- numpy reference ---------------------------------

def _reference_rows(img, params, thresh, anchors):
    """Dense numpy reference of the same forward (same stand-in backbone)."""
    img = np.asarray(img, np.float32)
    n, cin, h, w = img.shape
    h8, w8 = h // 8, w // 8
    p8 = img.reshape(n, cin, h8, 8, w8, 8).mean(axis=(3, 5))
    p16 = p8.reshape(n, cin, h8 // 2, 2, w8 // 2, 2).mean(axis=(3, 5))
    p32 = p16.reshape(n, cin, h8 // 4, 2, w8 // 4, 2).mean(axis=(3, 5))
    pooled = {8: p8, 16: p16, 32: p32}
    sig = lambda z: 1.0 / (1.0 + np.exp(-z))
    rows = []
    for key, stride in SCALES:
        hs, ws = h // stride, w // stride
        wgt = np.asarray(params[key]["w"], np.float32)
        bias = np.asarray(params[key]["b"], np.float32)
        head = np.einsum("nchw,ck->nhwk", pooled[stride], wgt) + bias
        head = head.reshape(n, hs, ws, N_ANCHORS, V)
        anc = np.asarray(anchors[key], np.float32)
        n_i, h_i, w_i, a_i = np.meshgrid(np.arange(n), np.arange(hs),
                                         np.arange(ws), np.arange(N_ANCHORS),
                                         indexing="ij")
        conf = sig(head[..., 0]).astype(np.float32)
        cx = ((w_i + sig(head[..., 1])) * stride).astype(np.float32)
        cy = ((h_i + sig(head[..., 2])) * stride).astype(np.float32)
        bw = (anc[a_i, 0] * np.exp(np.minimum(head[..., 3], EXP_CLAMP))).astype(np.float32)
        bh = (anc[a_i, 1] * np.exp(np.minimum(head[..., 4], EXP_CLAMP))).astype(np.float32)
        cls = np.argmax(head[..., 5:], axis=-1).astype(np.float32)
        keep = (conf > thresh).astype(np.float32)
        rows.append(np.stack([n_i.astype(np.float32), conf, cx, cy, bw, bh, cls, keep],
                             axis=-1).reshape(-1, N_FIELDS))
    return np.concatenate(rows, axis=0)


# --------------------------------- main ---------------------------------------

if __name__ == "__main__":
    key = jax.random.PRNGKey(0)
    k_img, k13w, k13b, k26w, k26b, k52w, k52b = jax.random.split(key, 7)

    # input image, NCHW, divisible by 32 (YOLO grids at strides 32/16/8)
    N, Cin, H, W = 2, 3, 256, 256
    x = jax.random.normal(k_img, (N, Cin, H, W), jnp.float32)

    params = {
        13: {"w": 0.1 * jax.random.normal(k13w, (Cin, C_OUT), jnp.float32),
             "b": 0.1 * jax.random.normal(k13b, (C_OUT,), jnp.float32)},
        26: {"w": 0.1 * jax.random.normal(k26w, (Cin, C_OUT), jnp.float32),
             "b": 0.1 * jax.random.normal(k26b, (C_OUT,), jnp.float32)},
        52: {"w": 0.1 * jax.random.normal(k52w, (Cin, C_OUT), jnp.float32),
             "b": 0.1 * jax.random.normal(k52b, (C_OUT,), jnp.float32)},
    }
    anchors = {
        13: [[116.0, 90.0], [156.0, 198.0], [373.0, 326.0]],
        26: [[30.0, 61.0], [62.0, 45.0], [59.0, 119.0]],
        52: [[10.0, 13.0], [16.0, 30.0], [33.0, 23.0]],
    }
    thresh = 0.45

    # thresh / anchors are compile-time constants of the kernel (no retracing).
    fwd = jax.jit(functools.partial(detector_forward, thresh=thresh, anchors=anchors))
    out_dev = jax.block_until_ready(fwd(x, params))

    # host-side de-interleave: (24, M_total) lane-dense slab -> (rows, 8),
    # rows ordered (n, h, w, anchor) with fields [n, cond, cx, cy, w, h, cls, keep]
    layout, m_total = _scale_layout(N, H, W)
    out_np = np.asarray(out_dev)
    assert out_np.shape == (N_FIELDS * N_ANCHORS, m_total)
    per_scale = []
    for _key, col0, m in layout:
        blk = out_np[:, col0:col0 + m]                       # (24, m), field-major
        per_scale.append(blk.reshape(N_FIELDS, N_ANCHORS, m)
                            .transpose(2, 1, 0).reshape(m * N_ANCHORS, N_FIELDS))
    rows_np = np.concatenate(per_scale, axis=0)

    # correctness check vs. dense numpy reference of the same forward
    ref = _reference_rows(x, params, thresh, anchors)
    expected_rows = sum(N * (H // s) * (W // s) * 3 for _k, s in SCALES)
    assert rows_np.shape == (expected_rows, N_FIELDS) == ref.shape
    assert np.all(np.isfinite(rows_np))
    assert np.allclose(rows_np[:, :6], ref[:, :6], rtol=1e-3, atol=1e-2)
    assert np.mean(rows_np[:, 6] == ref[:, 6]) > 0.999   # class argmax
    assert np.mean(rows_np[:, 7] == ref[:, 7]) > 0.999   # keep flag

    # dense -> sparse compaction (equivalent of torch mask/nonzero), numpy glue
    keep = rows_np[:, 7] > 0.5
    boxes = rows_np[keep, :7]          # [n, cond, cx, cy, w, h, cls]
    # TODO(synk): external nms(boxes, 0.1, method=1) util not provided;
    # returning the thresholded boxes in place of the NMS output.
    final_boxes = boxes
    assert final_boxes.ndim == 2 and final_boxes.shape[1] == 7
    print("KERNEL_OK")
</pallas_src>

<mosaic_0001>
module attributes {stable_mosaic.version = 11 : i64} {
  func.func @fused_head_decode_kernel(%arg0: i32, %arg1: memref<3x512xf32, #tpu.memory_space<vmem>>, %arg2: memref<1x30x3xf32, #tpu.memory_space<vmem>>, %arg3: memref<1x30x1xf32, #tpu.memory_space<vmem>>, %arg4: memref<1x13x1xf32, #tpu.memory_space<vmem>>, %arg5: memref<24x512xf32, #tpu.memory_space<vmem>>) attributes {dimension_semantics = [#tpu.dimension_semantics<parallel>], iteration_bounds = array<i64: 6>, scalar_prefetch = 0 : i64, scratch_operands = 0 : i64, tpu.core_type = #tpu.core_type<tc>, window_params = [{transform_indices = @transform_0, window_bounds = array<i64: 3, 512>}, {transform_indices = @transform_1, window_bounds = array<i64: 1, 30, 3>}, {transform_indices = @transform_2, window_bounds = array<i64: 1, 30, 1>}, {transform_indices = @transform_3, window_bounds = array<i64: 1, 13, 1>}, {transform_indices = @transform_4, window_bounds = array<i64: 24, 512>}]} {
    %c0 = arith.constant 0 : index
    %c0_0 = arith.constant 0 : index
    %0 = vector.load %arg1[%c0, %c0_0] : memref<3x512xf32, #tpu.memory_space<vmem>>, vector<3x512xf32>
    %c0_1 = arith.constant 0 : index
    %c0_2 = arith.constant 0 : index
    %c0_3 = arith.constant 0 : index
    %1 = vector.load %arg2[%c0_1, %c0_2, %c0_3] : memref<1x30x3xf32, #tpu.memory_space<vmem>>, vector<1x30x3xf32>
    %2 = vector.shape_cast %1 : vector<1x30x3xf32> to vector<30x3xf32>
    %c0_4 = arith.constant 0 : index
    %c0_5 = arith.constant 0 : index
    %c0_6 = arith.constant 0 : index
    %3 = vector.load %arg3[%c0_4, %c0_5, %c0_6] : memref<1x30x1xf32, #tpu.memory_space<vmem>>, vector<1x30x1xf32>
    %4 = vector.shape_cast %3 : vector<1x30x1xf32> to vector<30x1xf32>
    %c0_7 = arith.constant 0 : index
    %c0_8 = arith.constant 0 : index
    %c0_9 = arith.constant 0 : index
    %5 = vector.load %arg4[%c0_7, %c0_8, %c0_9] : memref<1x13x1xf32, #tpu.memory_space<vmem>>, vector<1x13x1xf32>
    %6 = vector.shape_cast %5 : vector<1x13x1xf32> to vector<13x1xf32>
    %7 = vector.extract_strided_slice %6 {offsets = [0, 0], sizes = [6, 1], strides = [1, 1]} : vector<13x1xf32> to vector<6x1xf32>
    %8 = vector.extract_strided_slice %6 {offsets = [6, 0], sizes = [1, 1], strides = [1, 1]} : vector<13x1xf32> to vector<1x1xf32>
    %9 = vector.extract_strided_slice %6 {offsets = [7, 0], sizes = [1, 1], strides = [1, 1]} : vector<13x1xf32> to vector<1x1xf32>
    %10 = vector.extract_strided_slice %6 {offsets = [8, 0], sizes = [1, 1], strides = [1, 1]} : vector<13x1xf32> to vector<1x1xf32>
    %11 = vector.extract_strided_slice %6 {offsets = [9, 0], sizes = [1, 1], strides = [1, 1]} : vector<13x1xf32> to vector<1x1xf32>
    %12 = vector.extract_strided_slice %6 {offsets = [10, 0], sizes = [1, 1], strides = [1, 1]} : vector<13x1xf32> to vector<1x1xf32>
    %13 = vector.extract_strided_slice %6 {offsets = [11, 0], sizes = [1, 1], strides = [1, 1]} : vector<13x1xf32> to vector<1x1xf32>
    %14 = vector.extract_strided_slice %6 {offsets = [12, 0], sizes = [1, 1], strides = [1, 1]} : vector<13x1xf32> to vector<1x1xf32>
    %15 = vector.extract_strided_slice %2 {offsets = [0, 0], sizes = [30, 1], strides = [1, 1]} : vector<30x3xf32> to vector<30x1xf32>
    %16 = vector.extract_strided_slice %0 {offsets = [0, 0], sizes = [1, 512], strides = [1, 1]} : vector<3x512xf32> to vector<1x512xf32>
    %17 = vector.broadcast %15 : vector<30x1xf32> to vector<30x512xf32>
    %18 = vector.broadcast %16 : vector<1x512xf32> to vector<30x512xf32>
    %19 = arith.mulf %17, %18 : vector<30x512xf32>
    %20 = vector.broadcast %4 : vector<30x1xf32> to vector<30x512xf32>
    %21 = arith.addf %20, %19 : vector<30x512xf32>
    %22 = vector.extract_strided_slice %2 {offsets = [0, 1], sizes = [30, 1], strides = [1, 1]} : vector<30x3xf32> to vector<30x1xf32>
    %23 = vector.extract_strided_slice %0 {offsets = [1, 0], sizes = [1, 512], strides = [1, 1]} : vector<3x512xf32> to vector<1x512xf32>
    %24 = vector.broadcast %22 : vector<30x1xf32> to vector<30x512xf32>
    %25 = vector.broadcast %23 : vector<1x512xf32> to vector<30x512xf32>
    %26 = arith.mulf %24, %25 : vector<30x512xf32>
    %27 = arith.addf %21, %26 : vector<30x512xf32>
    %28 = vector.extract_strided_slice %2 {offsets = [0, 2], sizes = [30, 1], strides = [1, 1]} : vector<30x3xf32> to vector<30x1xf32>
    %29 = vector.extract_strided_slice %0 {offsets = [2, 0], sizes = [1, 512], strides = [1, 1]} : vector<3x512xf32> to vector<1x512xf32>
    %30 = vector.broadcast %28 : vector<30x1xf32> to vector<30x512xf32>
    %31 = vector.broadcast %29 : vector<1x512xf32> to vector<30x512xf32>
    %32 = arith.mulf %30, %31 : vector<30x512xf32>
    %33 = arith.addf %27, %32 : vector<30x512xf32>
    %34 = tpu.iota {dimensions = array<i32: 1>} : vector<1x512xi32>
    %35 = arith.sitofp %34 : vector<1x512xi32> to vector<1x512xf32>
    %36 = vector.broadcast %13 : vector<1x1xf32> to vector<1x512xf32>
    %37 = arith.addf %36, %35 : vector<1x512xf32>
    %cst = arith.constant 5.000000e-01 : f32
    %38 = vector.broadcast %cst : f32 to vector<1x512xf32>
    %39 = arith.addf %37, %38 : vector<1x512xf32>
    %40 = vector.broadcast %10 : vector<1x1xf32> to vector<1x512xf32>
    %41 = arith.mulf %39, %40 : vector<1x512xf32>
    %42 = math.floor %41 : vector<1x512xf32>
    %43 = vector.broadcast %9 : vector<1x1xf32> to vector<1x512xf32>
    %44 = arith.mulf %42, %43 : vector<1x512xf32>
    %45 = arith.subf %37, %44 : vector<1x512xf32>
    %cst_10 = arith.constant 5.000000e-01 : f32
    %46 = vector.broadcast %cst_10 : f32 to vector<1x512xf32>
    %47 = arith.addf %45, %46 : vector<1x512xf32>
    %48 = vector.broadcast %12 : vector<1x1xf32> to vector<1x512xf32>
    %49 = arith.mulf %47, %48 : vector<1x512xf32>
    %50 = math.floor %49 : vector<1x512xf32>
    %51 = vector.broadcast %11 : vector<1x1xf32> to vector<1x512xf32>
    %52 = arith.mulf %50, %51 : vector<1x512xf32>
    %53 = arith.subf %45, %52 : vector<1x512xf32>
    %54 = vector.broadcast %14 : vector<1x1xf32> to vector<1x512xf32>
    %55 = arith.cmpf olt, %37, %54 : vector<1x512xf32>
    %56 = vector.extract_strided_slice %33 {offsets = [0, 0], sizes = [9, 512], strides = [1, 1]} : vector<30x512xf32> to vector<9x512xf32>
    %57 = arith.negf %56 : vector<9x512xf32>
    %58 = math.exp %57 : vector<9x512xf32>
    %cst_11 = arith.constant 1.000000e+00 : f32
    %59 = vector.broadcast %cst_11 : f32 to vector<9x512xf32>
    %60 = arith.addf %59, %58 : vector<9x512xf32>
    %61 = arith.divf %59, %60 : vector<9x512xf32>
    %62 = vector.extract_strided_slice %61 {offsets = [0, 0], sizes = [3, 512], strides = [1, 1]} : vector<9x512xf32> to vector<3x512xf32>
    %63 = vector.extract_strided_slice %61 {offsets = [3, 0], sizes = [3, 512], strides = [1, 1]} : vector<9x512xf32> to vector<3x512xf32>
    %64 = vector.broadcast %53 : vector<1x512xf32> to vector<3x512xf32>
    %65 = arith.addf %64, %63 : vector<3x512xf32>
    %66 = vector.broadcast %8 : vector<1x1xf32> to vector<3x512xf32>
    %67 = arith.mulf %65, %66 : vector<3x512xf32>
    %68 = vector.extract_strided_slice %61 {offsets = [6, 0], sizes = [3, 512], strides = [1, 1]} : vector<9x512xf32> to vector<3x512xf32>
    %69 = vector.broadcast %50 : vector<1x512xf32> to vector<3x512xf32>
    %70 = arith.addf %69, %68 : vector<3x512xf32>
    %71 = vector.broadcast %8 : vector<1x1xf32> to vector<3x512xf32>
    %72 = arith.mulf %70, %71 : vector<3x512xf32>
    %73 = vector.extract_strided_slice %33 {offsets = [9, 0], sizes = [6, 512], strides = [1, 1]} : vector<30x512xf32> to vector<6x512xf32>
    %cst_12 = arith.constant 3.000000e+01 : f32
    %74 = vector.broadcast %cst_12 : f32 to vector<6x512xf32>
    %75 = arith.minimumf %73, %74 : vector<6x512xf32>
    %76 = math.exp %75 : vector<6x512xf32>
    %77 = vector.broadcast %7 : vector<6x1xf32> to vector<6x512xf32>
    %78 = arith.mulf %77, %76 : vector<6x512xf32>
    %79 = vector.extract_strided_slice %33 {offsets = [15, 0], sizes = [3, 512], strides = [1, 1]} : vector<30x512xf32> to vector<3x512xf32>
    %cst_13 = arith.constant 0.000000e+00 : f32
    %80 = vector.broadcast %cst_13 : f32 to vector<3x512xf32>
    %81 = vector.extract_strided_slice %33 {offsets = [18, 0], sizes = [3, 512], strides = [1, 1]} : vector<30x512xf32> to vector<3x512xf32>
    %82 = arith.cmpf ogt, %81, %79 : vector<3x512xf32>
    %83 = arith.select %82, %81, %79 : vector<3x512xi1>, vector<3x512xf32>
    %cst_14 = arith.constant 1.000000e+00 : f32
    %84 = vector.broadcast %cst_14 : f32 to vector<3x512xf32>
    %85 = arith.select %82, %84, %80 : vector<3x512xi1>, vector<3x512xf32>
    %86 = vector.extract_strided_slice %33 {offsets = [21, 0], sizes = [3, 512], strides = [1, 1]} : vector<30x512xf32> to vector<3x512xf32>
    %87 = arith.cmpf ogt, %86, %83 : vector<3x512xf32>
    %88 = arith.select %87, %86, %83 : vector<3x512xi1>, vector<3x512xf32>
    %cst_15 = arith.constant 2.000000e+00 : f32
    %89 = vector.broadcast %cst_15 : f32 to vector<3x512xf32>
    %90 = arith.select %87, %89, %85 : vector<3x512xi1>, vector<3x512xf32>
    %91 = vector.extract_strided_slice %33 {offsets = [24, 0], sizes = [3, 512], strides = [1, 1]} : vector<30x512xf32> to vector<3x512xf32>
    %92 = arith.cmpf ogt, %91, %88 : vector<3x512xf32>
    %93 = arith.select %92, %91, %88 : vector<3x512xi1>, vector<3x512xf32>
    %cst_16 = arith.constant 3.000000e+00 : f32
    %94 = vector.broadcast %cst_16 : f32 to vector<3x512xf32>
    %95 = arith.select %92, %94, %90 : vector<3x512xi1>, vector<3x512xf32>
    %96 = vector.extract_strided_slice %33 {offsets = [27, 0], sizes = [3, 512], strides = [1, 1]} : vector<30x512xf32> to vector<3x512xf32>
    %97 = arith.cmpf ogt, %96, %93 : vector<3x512xf32>
    %cst_17 = arith.constant 4.000000e+00 : f32
    %98 = vector.broadcast %cst_17 : f32 to vector<3x512xf32>
    %99 = arith.select %97, %98, %95 : vector<3x512xi1>, vector<3x512xf32>
    %cst_18 = arith.constant 4.500000e-01 : f32
    %100 = vector.broadcast %cst_18 : f32 to vector<3x512xf32>
    %101 = arith.cmpf ogt, %62, %100 : vector<3x512xf32>
    %102 = vector.broadcast %55 : vector<1x512xi1> to vector<3x512xi1>
    %103 = arith.andi %101, %102 : vector<3x512xi1>
    %104 = arith.extui %103 : vector<3x512xi1> to vector<3x512xi32>
    %105 = arith.sitofp %104 : vector<3x512xi32> to vector<3x512xf32>
    %106 = vector.shape_cast %42 : vector<1x512xf32> to vector<1x512xf32>
    %107 = vector.broadcast %106 : vector<1x512xf32> to vector<3x512xf32>
    %108 = tpu.concatenate %107, %62, %67, %72, %78, %99, %105 in 0 : vector<3x512xf32>, vector<3x512xf32>, vector<3x512xf32>, vector<3x512xf32>, vector<6x512xf32>, vector<3x512xf32>, vector<3x512xf32> -> vector<24x512xf32>
    %c0_19 = arith.constant 0 : index
    %c0_20 = arith.constant 0 : index
    %109 = vector.load %arg5[%c0_19, %c0_20] : memref<24x512xf32, #tpu.memory_space<vmem>>, vector<24x512xf32>
    tpu.vector_store %arg5[%c0_19, %c0_20], %108 {strides = array<i32>} : memref<24x512xf32, #tpu.memory_space<vmem>>, vector<24x512xf32>,
    return
  }
  func.func @transform_0(%arg0: i32) -> (i32, i32) {
    %c0_i32 = arith.constant 0 : i32
    %c0_i32_0 = arith.constant 0 : i32
    return %c0_i32, %arg0 : i32, i32
  }
  func.func @transform_1(%arg0: i32) -> (i32, i32, i32) {
    %c0_i32 = arith.constant 0 : i32
    %c0_i32_0 = arith.constant 0 : i32
    %c0_i32_1 = arith.constant 0 : i32
    return %arg0, %c0_i32, %c0_i32_0 : i32, i32, i32
  }
  func.func @transform_2(%arg0: i32) -> (i32, i32, i32) {
    %c0_i32 = arith.constant 0 : i32
    %c0_i32_0 = arith.constant 0 : i32
    %c0_i32_1 = arith.constant 0 : i32
    return %arg0, %c0_i32, %c0_i32_0 : i32, i32, i32
  }
  func.func @transform_3(%arg0: i32) -> (i32, i32, i32) {
    %c0_i32 = arith.constant 0 : i32
    %c0_i32_0 = arith.constant 0 : i32
    %c0_i32_1 = arith.constant 0 : i32
    return %arg0, %c0_i32, %c0_i32_0 : i32, i32, i32
  }
  func.func @transform_4(%arg0: i32) -> (i32, i32) {
    %c0_i32 = arith.constant 0 : i32
    %c0_i32_0 = arith.constant 0 : i32
    return %c0_i32, %arg0 : i32, i32
  }
}

</mosaic_0001>

<llo_original>
// kernel: detector_forward.1
$region0: #{detector_forward.1}
  #allocation0 [shape = 'u32[]', space=smem, size = 0x4, offset = 0x4, fixed_abs, tag = 'smem constant byte address 0x4 - core index']
  #allocation1 [shape = 'u32[144,128]{1,0:T(1,128)}', space=vmem, size = 0x12000, scoped, tag = 'internal scratch']
  %s0 = inlined_call_operand.vmem [shape: f32[3,3072], index: 0, kind: input, shape index: {}]
  %s1 = inlined_call_operand.vmem [shape: f32[6,30,3], index: 1, kind: input, shape index: {}]
  %s2 = inlined_call_operand.vmem [shape: f32[6,30,1], index: 2, kind: input, shape index: {}]
  %s3 = inlined_call_operand.vmem [shape: f32[6,13,1], index: 3, kind: input, shape index: {}]
  %s4 = inlined_call_operand.hbm [shape: f32[24,3072], index: 4, kind: output, shape index: {}]
  %s5 = sld [smem:[#allocation0]]
  $region49: #{detector_forward.1} parent=0
    _
  %s7 = ssub.s32 1, %s5
  %s8 = scalar_select 0, %s7, %s5
  $region1: #{detector_forward.1} parent=0
    #allocation2 [shape = 'u8[98304]{0}', space=vmem, size = 0x18000, scoped, tag = 'output window, operand 0']
    #allocation3 [shape = 's32[2]{0}', space=sflag, size = 0x8, scoped, tag = 'scoped memory for detector_forward.1']
    %9 = vsyncpa [#allocation3], 0
    %s10 = scalar_lea.sflag [#allocation3], 1
    %11 = vsyncpa %s10, 0
    loop: start=0, step=1, limit=8
    $region2: #{detector_forward.1} parent=1 // loop_pre_header
      _
    $region3: #{detector_forward.1} parent=1 // loop_header
      %s13 = sphi 0, %s17
      %p14 = scmp.ge.s32.totalorder %s13, 8
      %s23 = sphi 0, %s25
      %s26 = sphi 0, %s23
      %s27 = sphi 0, %s26
      %s43 = sphi 0, %s27
      %s49 = sphi 0, %s51
      %s52 = sphi 0, %s49
      %s53 = sphi 0, %s52
      %s69 = sphi 0, %s53
      %s75 = sphi 0, %s77
      %s78 = sphi 0, %s75
      %s79 = sphi 0, %s78
      %s95 = sphi 0, %s79
      %s101 = sphi 0, %s103
      %s104 = sphi 0, %s101
      %s105 = sphi 0, %s104
      %s121 = sphi 0, %s105
      %s127 = sphi 0, %s129
      %s130 = sphi 0, %s127
      %s131 = sphi 0, %s130
      %s147 = sphi 0, %s131
    $region4: #{detector_forward.1} parent=1 // loop_header_branch
      %16 = sbr.rel (%p14) target = $region8
    $region5: #{detector_forward.1} parent=1 // loop_body
      %s18 = ssub.s32 %s13, 1
      %s19 = ssub.s32 %s13, 2
      %s20 = sadd.s32 %s13, 1
      %s21 = ssub.s32 %s13, %s20
      %p22 = scmp.eq.s32.totalorder %s21, 0
      %s24 = sadd.s32 %s23, 1
      %s25 = scalar_select %p22, %s23, %s24
      %p28 = pneg %p22
      %p29 = scmp.eq.s32.totalorder %s13, 5
      %p30 = por %p28, %p29
      %p31 = scmp.ne.s32.totalorder %s23, %s26
      %p32 = scmp.eq.s32.totalorder %s13, 0
      %p33 = por %p31, %p32
      %p34 = scmp.ne.s32.totalorder %s23, %s26
      %p35 = scmp.eq.s32.totalorder %s18, 5
      %p36 = por %p34, %p35
      %p37 = scmp.ne.s32.totalorder %s26, %s27
      %p38 = scmp.eq.s32.totalorder %s18, 0
      %p39 = por %p37, %p38
      %p40 = scmp.ne.s32.totalorder %s26, %s27
      %p41 = scmp.eq.s32.totalorder %s19, 5
      %p42 = por %p40, %p41
      %p44 = scmp.ne.s32.totalorder %s27, %s43
      %p45 = scmp.eq.s32.totalorder %s19, 0
      %p46 = por %p44, %p45
      %s47 = ssub.s32 %s13, %s20
      %p48 = scmp.eq.s32.totalorder %s47, 0
      %s50 = sadd.s32 %s49, 1
      %s51 = scalar_select %p48, %s49, %s50
      %p54 = pneg %p48
      %p55 = scmp.eq.s32.totalorder %s13, 5
      %p56 = por %p54, %p55
      %p57 = scmp.ne.s32.totalorder %s49, %s52
      %p58 = scmp.eq.s32.totalorder %s13, 0
      %p59 = por %p57, %p58
      %p60 = scmp.ne.s32.totalorder %s49, %s52
      %p61 = scmp.eq.s32.totalorder %s18, 5
      %p62 = por %p60, %p61
      %p63 = scmp.ne.s32.totalorder %s52, %s53
      %p64 = scmp.eq.s32.totalorder %s18, 0
      %p65 = por %p63, %p64
      %p66 = scmp.ne.s32.totalorder %s52, %s53
      %p67 = scmp.eq.s32.totalorder %s19, 5
      %p68 = por %p66, %p67
      %p70 = scmp.ne.s32.totalorder %s53, %s69
      %p71 = scmp.eq.s32.totalorder %s19, 0
      %p72 = por %p70, %p71
      %s73 = ssub.s32 %s13, %s20
      %p74 = scmp.eq.s32.totalorder %s73, 0
      %s76 = sadd.s32 %s75, 1
      %s77 = scalar_select %p74, %s75, %s76
      %p80 = pneg %p74
      %p81 = scmp.eq.s32.totalorder %s13, 5
      %p82 = por %p80, %p81
      %p83 = scmp.ne.s32.totalorder %s75, %s78
      %p84 = scmp.eq.s32.totalorder %s13, 0
      %p85 = por %p83, %p84
      %p86 = scmp.ne.s32.totalorder %s75, %s78
      %p87 = scmp.eq.s32.totalorder %s18, 5
      %p88 = por %p86, %p87
      %p89 = scmp.ne.s32.totalorder %s78, %s79
      %p90 = scmp.eq.s32.totalorder %s18, 0
      %p91 = por %p89, %p90
      %p92 = scmp.ne.s32.totalorder %s78, %s79
      %p93 = scmp.eq.s32.totalorder %s19, 5
      %p94 = por %p92, %p93
      %p96 = scmp.ne.s32.totalorder %s79, %s95
      %p97 = scmp.eq.s32.totalorder %s19, 0
      %p98 = por %p96, %p97
      %s99 = ssub.s32 %s13, %s20
      %p100 = scmp.eq.s32.totalorder %s99, 0
      %s102 = sadd.s32 %s101, 1
      %s103 = scalar_select %p100, %s101, %s102
      %p106 = pneg %p100
      %p107 = scmp.eq.s32.totalorder %s13, 5
      %p108 = por %p106, %p107
      %p109 = scmp.ne.s32.totalorder %s101, %s104
      %p110 = scmp.eq.s32.totalorder %s13, 0
      %p111 = por %p109, %p110
      %p112 = scmp.ne.s32.totalorder %s101, %s104
      %p113 = scmp.eq.s32.totalorder %s18, 5
      %p114 = por %p112, %p113
      %p115 = scmp.ne.s32.totalorder %s104, %s105
      %p116 = scmp.eq.s32.totalorder %s18, 0
      %p117 = por %p115, %p116
      %p118 = scmp.ne.s32.totalorder %s104, %s105
      %p119 = scmp.eq.s32.totalorder %s19, 5
      %p120 = por %p118, %p119
      %p122 = scmp.ne.s32.totalorder %s105, %s121
      %p123 = scmp.eq.s32.totalorder %s19, 0
      %p124 = por %p122, %p123
      %s125 = ssub.s32 %s13, %s20
      %p126 = scmp.eq.s32.totalorder %s125, 0
      %s128 = sadd.s32 %s127, 1
      %s129 = scalar_select %p126, %s127, %s128
      %p132 = pneg %p126
      %p133 = scmp.eq.s32.totalorder %s13, 5
      %p134 = por %p132, %p133
      %p135 = scmp.ne.s32.totalorder %s127, %s130
      %p136 = scmp.eq.s32.totalorder %s13, 0
      %p137 = por %p135, %p136
      %p138 = scmp.ne.s32.totalorder %s127, %s130
      %p139 = scmp.eq.s32.totalorder %s18, 5
      %p140 = por %p138, %p139
      %p141 = scmp.ne.s32.totalorder %s130, %s131
      %p142 = scmp.eq.s32.totalorder %s18, 0
      %p143 = por %p141, %p142
      %p144 = scmp.ne.s32.totalorder %s130, %s131
      %p145 = scmp.eq.s32.totalorder %s19, 5
      %p146 = por %p144, %p145
      %p148 = scmp.ne.s32.totalorder %s131, %s147
      %p149 = scmp.eq.s32.totalorder %s19, 0
      %p150 = por %p148, %p149
      %p151 = scmp.le.s32.totalorder 1, %s13
      %p152 = scmp.lt.s32.totalorder %s13, 7
      %p153 = pnand %p151, %p152
      %p154 = pneg %p153
      // Predicated region
      $region9: #{detector_forward.1} parent=5 // pred_check
        _
      $region10: #{detector_forward.1} parent=5 // pred_check_branch
        %156 = sbr.rel (%p153) target = $region12
      $region11: #{detector_forward.1} parent=5 // pred_region
        %s157 = ssub.s32 %s13, 1
      $region12: #{detector_forward.1} parent=5 // pred_fallthru
        _
      %p158 = scmp.lt.s32.totalorder %s13, 6
      // Predicated region
      $region13: #{detector_forward.1} parent=5 // pred_check
        %p159 = pneg %p158
      $region14: #{detector_forward.1} parent=5 // pred_check_branch
        %161 = sbr.rel (%p159) target = $region16
      $region15: #{detector_forward.1} parent=5 // pred_region
        // Predicated region
        $region17: #{detector_forward.1} parent=15 // pred_check
          %p162 = pneg %p33
        $region18: #{detector_forward.1} parent=15 // pred_check_branch
          %164 = sbr.rel (%p162) target = $region20
        $region19: #{detector_forward.1} parent=15 // pred_region
          %s165 = smul.u32 4, %s13
          %p166 = scmp.lt.s32.totalorder %s165, 23
          %s167 = scalar_select %p166, %s165, 23
          %s168 = smul.addr %s167, 4
          %s169 = scalar_lea.vmem %s0, %s168
          %s170 = smul.u32 4, %s13
        $region20: #{detector_forward.1} parent=15 // pred_fallthru
          _
        // Predicated region
        $region21: #{detector_forward.1} parent=15 // pred_check
          %p171 = pneg %p59
        $region22: #{detector_forward.1} parent=15 // pred_check_branch
          %173 = sbr.rel (%p171) target = $region24
        $region23: #{detector_forward.1} parent=15 // pred_region
          %p174 = scmp.lt.s32.totalorder %s13, 5
          %s175 = scalar_select %p174, %s13, 5
          %s176 = smul.addr %s175, 4
          %s177 = smul.addr %s176, 8
          %s178 = scalar_lea.vmem %s1, %s177
        $region24: #{detector_forward.1} parent=15 // pred_fallthru
          _
        // Predicated region
        $region25: #{detector_forward.1} parent=15 // pred_check
          %p179 = pneg %p85
        $region26: #{detector_forward.1} parent=15 // pred_check_branch
          %181 = sbr.rel (%p179) target = $region28
        $region27: #{detector_forward.1} parent=15 // pred_region
          %p182 = scmp.lt.s32.totalorder %s13, 5
          %s183 = scalar_select %p182, %s13, 5
          %s184 = smul.addr %s183, 4
          %s185 = smul.addr %s184, 8
          %s186 = scalar_lea.vmem %s2, %s185
        $region28: #{detector_forward.1} parent=15 // pred_fallthru
          _
        // Predicated region
        $region29: #{detector_forward.1} parent=15 // pred_check
          %p187 = pneg %p111
        $region30: #{detector_forward.1} parent=15 // pred_check_branch
          %189 = sbr.rel (%p187) target = $region32
        $region31: #{detector_forward.1} parent=15 // pred_region
          %p190 = scmp.lt.s32.totalorder %s13, 5
          %s191 = scalar_select %p190, %s13, 5
          %s192 = smul.addr %s191, 2
          %s193 = smul.addr %s192, 8
          %s194 = scalar_lea.vmem %s3, %s193
        $region32: #{detector_forward.1} parent=15 // pred_fallthru
          _
      $region16: #{detector_forward.1} parent=5 // pred_fallthru
        _
      %p195 = scmp.le.s32.totalorder 1, %s13
      %p196 = scmp.lt.s32.totalorder %s13, 7
      %p197 = pnand %p195, %p196
      %p198 = pneg %p197
      // Predicated region
      $region33: #{detector_forward.1} parent=5 // pred_check
        _
      $region34: #{detector_forward.1} parent=5 // pred_check_branch
        %200 = sbr.rel (%p197) target = $region36
      $region35: #{detector_forward.1} parent=5 // pred_region
        %s201 = ssub.s32 %s13, 1
        %s202 = smul.u32 4, %s18
        %p203 = scmp.lt.s32.totalorder %s202, 23
        %s204 = scalar_select %p203, %s202, 23
        %s205 = smul.addr %s204, 4
        %s206 = scalar_lea.vmem %s0, %s205
        %p207 = pneg %p39
        %p208 = pneg %p36
        %p209 = scmp.lt.s32.totalorder %s18, 5
        %s210 = scalar_select %p209, %s18, 5
        %s211 = smul.addr %s210, 4
        %s212 = smul.addr %s211, 8
        %s213 = scalar_lea.vmem %s1, %s212
        %p214 = pneg %p65
        %p215 = pneg %p62
        %p216 = scmp.lt.s32.totalorder %s18, 5
        %s217 = scalar_select %p216, %s18, 5
        %s218 = smul.addr %s217, 4
        %s219 = smul.addr %s218, 8
        %s220 = scalar_lea.vmem %s2, %s219
        %p221 = pneg %p91
        %p222 = pneg %p88
        %p223 = scmp.lt.s32.totalorder %s18, 5
        %s224 = scalar_select %p223, %s18, 5
        %s225 = smul.addr %s224, 2
        %s226 = smul.addr %s225, 8
        %s227 = scalar_lea.vmem %s3, %s226
        %p228 = pneg %p117
        %p229 = pneg %p114
        %p230 = pneg %p143
        %p231 = pneg %p140
        %s232 = sand.u32 %s130, 1
        %s233 = scalar_lea.sflag [#allocation3], %s232
        %s234 = sand.u32 %s130, 1
        %s235 = smul.addr %s234, 96
        %s236 = scalar_lea.vmem [#allocation2], %s235
        %s237 = smul.u32 4, %s18
        %p238 = scmp.lt.s32.totalorder %s237, 23
        %s239 = scalar_select %p238, %s237, 23
        %s240 = smul.addr %s239, 4
        %s241 = scalar_lea.vmem %s0, %s240
        %s242 = smul.u32 4, %s18
        %p243 = scmp.lt.s32.totalorder %s18, 5
        %s244 = scalar_select %p243, %s18, 5
        %s245 = smul.addr %s244, 4
        %s246 = smul.addr %s245, 8
        %s247 = scalar_lea.vmem %s1, %s246
        %p248 = scmp.lt.s32.totalorder %s18, 5
        %s249 = scalar_select %p248, %s18, 5
        %s250 = smul.addr %s249, 4
        %s251 = smul.addr %s250, 8
        %s252 = scalar_lea.vmem %s2, %s251
        %p253 = scmp.lt.s32.totalorder %s18, 5
        %s254 = scalar_select %p253, %s18, 5
        %s255 = smul.addr %s254, 2
        %s256 = smul.addr %s255, 8
        %s257 = scalar_lea.vmem %s3, %s256
        %s258 = smul.u32 4, %s18
        %v259 = vld [vmem:[%s241] sm:$0x77]
        %v260 = vld [vmem:[%s241 + $0x8] sm:$0x77]
        %v261 = vld [vmem:[%s247] sm:$0xff]
        %v262 = vld [vmem:[%s247 + $0x8] sm:$0xff]
        %v263 = vld [vmem:[%s247 + $0x10] sm:$0xff]
        %v264 = vld [vmem:[%s247 + $0x18] sm:$0x3f]
        %v265 = vld [vmem:[%s252] sm:$0xff]
        %v266 = vld [vmem:[%s252 + $0x8] sm:$0xff]
        %v267 = vld [vmem:[%s252 + $0x10] sm:$0xff]
        %v268 = vld [vmem:[%s252 + $0x18] sm:$0x3f]
        %v269 = vld [vmem:[%s257] sm:$0xff]
        %v270 = vld [vmem:[%s257 + $0x8] sm:$0x1f]
        %272 = vset.pattern.permute.xlu0 0
        %273 = vperm.xlu0 %272, %v261
        %v274 = vpop.permute.xlu0 %273
        %277 = vset.pattern.permute.xlu0 0
        %278 = vperm.xlu0 %277, %v262
        %v279 = vpop.permute.xlu0 %278
        %282 = vset.pattern.permute.xlu0 0
        %283 = vperm.xlu0 %282, %v263
        %v284 = vpop.permute.xlu0 %283
        %287 = vset.pattern.permute.xlu0 0
        %288 = vperm.xlu0 %287, %v264
        %v289 = vpop.permute.xlu0 %288
        %v293 = vlaneseq
        %v294 = vshrl.u32 %v293, 7
        %v295 = vsub.s32 0, %v294
        %v296 = vrot.slane %v259, %v295
        %v297 = vlaneseq
        %v298 = vshrl.u32 %v297, 7
        %v299 = vsub.s32 4, %v298
        %v300 = vrot.slane %v259, %v299
        %v301 = vlaneseq
        %v302 = vshrl.u32 %v301, 7
        %v303 = vsub.s32 0, %v302
        %v304 = vrot.slane %v260, %v303
        %v305 = vlaneseq
        %v306 = vshrl.u32 %v305, 7
        %v307 = vsub.s32 4, %v306
        %v308 = vrot.slane %v260, %v307
        %v313 = vlaneseq
        %v314 = vshrl.u32 %v313, 7
        %v315 = vsub.s32 0, %v314
        %v316 = vrot.slane %v296, %v315
        %v317 = vlaneseq
        %v318 = vshrl.u32 %v317, 7
        %v319 = vsub.s32 0, %v318
        %v320 = vrot.slane %v300, %v319
        %v321 = vlaneseq
        %v322 = vshrl.u32 %v321, 7
        %v323 = vsub.s32 0, %v322
        %v324 = vrot.slane %v304, %v323
        %v325 = vlaneseq
        %v326 = vshrl.u32 %v325, 7
        %v327 = vsub.s32 0, %v326
        %v328 = vrot.slane %v308, %v327
        %v329 = vmul.f32 %v274, %v316
        %v330 = vmul.f32 %v274, %v320
        %v331 = vmul.f32 %v274, %v324
        %v332 = vmul.f32 %v274, %v328
        %v333 = vmul.f32 %v279, %v316
        %v334 = vmul.f32 %v279, %v320
        %v335 = vmul.f32 %v279, %v324
        %v336 = vmul.f32 %v279, %v328
        %v337 = vmul.f32 %v284, %v316
        %v338 = vmul.f32 %v284, %v320
        %v339 = vmul.f32 %v284, %v324
        %v340 = vmul.f32 %v284, %v328
        %v341 = vmul.f32 %v289, %v316
        %v342 = vmul.f32 %v289, %v320
        %v343 = vmul.f32 %v289, %v324
        %v344 = vmul.f32 %v289, %v328
        %346 = vset.pattern.permute.xlu0 0
        %347 = vperm.xlu0 %346, %v265
        %v348 = vpop.permute.xlu0 %347
        %351 = vset.pattern.permute.xlu0 0
        %352 = vperm.xlu0 %351, %v266
        %v353 = vpop.permute.xlu0 %352
        %356 = vset.pattern.permute.xlu0 0
        %357 = vperm.xlu0 %356, %v267
        %v358 = vpop.permute.xlu0 %357
        %361 = vset.pattern.permute.xlu0 0
        %362 = vperm.xlu0 %361, %v268
        %v363 = vpop.permute.xlu0 %362
        %v365 = vadd.f32 %v348, %v329
        %v366 = vadd.f32 %v348, %v330
        %v367 = vadd.f32 %v348, %v331
        %v368 = vadd.f32 %v348, %v332
        %v369 = vadd.f32 %v353, %v333
        %v370 = vadd.f32 %v353, %v334
        %v371 = vadd.f32 %v353, %v335
        %v372 = vadd.f32 %v353, %v336
        %v373 = vadd.f32 %v358, %v337
        %v374 = vadd.f32 %v358, %v338
        %v375 = vadd.f32 %v358, %v339
        %v376 = vadd.f32 %v358, %v340
        %v377 = vadd.f32 %v363, %v341
        %v378 = vadd.f32 %v363, %v342
        %v379 = vadd.f32 %v363, %v343
        %v380 = vadd.f32 %v363, %v344
        %381 = vset.pattern.permute.xlu0 1
        %382 = vperm.xlu0 %381, %v261
        %v383 = vpop.permute.xlu0 %382
        %385 = vset.pattern.permute.xlu0 1
        %386 = vperm.xlu0 %385, %v262
        %v387 = vpop.permute.xlu0 %386
        %389 = vset.pattern.permute.xlu0 1
        %390 = vperm.xlu0 %389, %v263
        %v391 = vpop.permute.xlu0 %390
        %393 = vset.pattern.permute.xlu0 1
        %394 = vperm.xlu0 %393, %v264
        %v395 = vpop.permute.xlu0 %394
        %v397 = vlaneseq
        %v398 = vshrl.u32 %v397, 7
        %v399 = vsub.s32 1, %v398
        %v400 = vrot.slane %v259, %v399
        %v401 = vlaneseq
        %v402 = vshrl.u32 %v401, 7
        %v403 = vsub.s32 5, %v402
        %v404 = vrot.slane %v259, %v403
        %v405 = vlaneseq
        %v406 = vshrl.u32 %v405, 7
        %v407 = vsub.s32 1, %v406
        %v408 = vrot.slane %v260, %v407
        %v409 = vlaneseq
        %v410 = vshrl.u32 %v409, 7
        %v411 = vsub.s32 5, %v410
        %v412 = vrot.slane %v260, %v411
        %v417 = vlaneseq
        %v418 = vshrl.u32 %v417, 7
        %v419 = vsub.s32 1, %v418
        %v420 = vrot.slane %v400, %v419
        %v421 = vlaneseq
        %v422 = vshrl.u32 %v421, 7
        %v423 = vsub.s32 1, %v422
        %v424 = vrot.slane %v404, %v423
        %v425 = vlaneseq
        %v426 = vshrl.u32 %v425, 7
        %v427 = vsub.s32 1, %v426
        %v428 = vrot.slane %v408, %v427
        %v429 = vlaneseq
        %v430 = vshrl.u32 %v429, 7
        %v431 = vsub.s32 1, %v430
        %v432 = vrot.slane %v412, %v431
        %v433 = vmul.f32 %v383, %v420
        %v434 = vmul.f32 %v383, %v424
        %v435 = vmul.f32 %v383, %v428
        %v436 = vmul.f32 %v383, %v432
        %v437 = vmul.f32 %v387, %v420
        %v438 = vmul.f32 %v387, %v424
        %v439 = vmul.f32 %v387, %v428
        %v440 = vmul.f32 %v387, %v432
        %v441 = vmul.f32 %v391, %v420
        %v442 = vmul.f32 %v391, %v424
        %v443 = vmul.f32 %v391, %v428
        %v444 = vmul.f32 %v391, %v432
        %v445 = vmul.f32 %v395, %v420
        %v446 = vmul.f32 %v395, %v424
        %v447 = vmul.f32 %v395, %v428
        %v448 = vmul.f32 %v395, %v432
        %v449 = vadd.f32 %v365, %v433
        %v450 = vadd.f32 %v366, %v434
        %v451 = vadd.f32 %v367, %v435
        %v452 = vadd.f32 %v368, %v436
        %v453 = vadd.f32 %v369, %v437
        %v454 = vadd.f32 %v370, %v438
        %v455 = vadd.f32 %v371, %v439
        %v456 = vadd.f32 %v372, %v440
        %v457 = vadd.f32 %v373, %v441
        %v458 = vadd.f32 %v374, %v442
        %v459 = vadd.f32 %v375, %v443
        %v460 = vadd.f32 %v376, %v444
        %v461 = vadd.f32 %v377, %v445
        %v462 = vadd.f32 %v378, %v446
        %v463 = vadd.f32 %v379, %v447
        %v464 = vadd.f32 %v380, %v448
        %465 = vset.pattern.permute.xlu0 2
        %466 = vperm.xlu0 %465, %v261
        %v467 = vpop.permute.xlu0 %466
        %469 = vset.pattern.permute.xlu0 2
        %470 = vperm.xlu0 %469, %v262
        %v471 = vpop.permute.xlu0 %470
        %473 = vset.pattern.permute.xlu0 2
        %474 = vperm.xlu0 %473, %v263
        %v475 = vpop.permute.xlu0 %474
        %477 = vset.pattern.permute.xlu0 2
        %478 = vperm.xlu0 %477, %v264
        %v479 = vpop.permute.xlu0 %478
        %v481 = vlaneseq
        %v482 = vshrl.u32 %v481, 7
        %v483 = vsub.s32 2, %v482
        %v484 = vrot.slane %v259, %v483
        %v485 = vlaneseq
        %v486 = vshrl.u32 %v485, 7
        %v487 = vsub.s32 6, %v486
        %v488 = vrot.slane %v259, %v487
        %v489 = vlaneseq
        %v490 = vshrl.u32 %v489, 7
        %v491 = vsub.s32 2, %v490
        %v492 = vrot.slane %v260, %v491
        %v493 = vlaneseq
        %v494 = vshrl.u32 %v493, 7
        %v495 = vsub.s32 6, %v494
        %v496 = vrot.slane %v260, %v495
        %v501 = vlaneseq
        %v502 = vshrl.u32 %v501, 7
        %v503 = vsub.s32 2, %v502
        %v504 = vrot.slane %v484, %v503
        %v505 = vlaneseq
        %v506 = vshrl.u32 %v505, 7
        %v507 = vsub.s32 2, %v506
        %v508 = vrot.slane %v488, %v507
        %v509 = vlaneseq
        %v510 = vshrl.u32 %v509, 7
        %v511 = vsub.s32 2, %v510
        %v512 = vrot.slane %v492, %v511
        %v513 = vlaneseq
        %v514 = vshrl.u32 %v513, 7
        %v515 = vsub.s32 2, %v514
        %v516 = vrot.slane %v496, %v515
        %v517 = vmul.f32 %v467, %v504
        %v518 = vmul.f32 %v467, %v508
        %v519 = vmul.f32 %v467, %v512
        %v520 = vmul.f32 %v467, %v516
        %v521 = vmul.f32 %v471, %v504
        %v522 = vmul.f32 %v471, %v508
        %v523 = vmul.f32 %v471, %v512
        %v524 = vmul.f32 %v471, %v516
        %v525 = vmul.f32 %v475, %v504
        %v526 = vmul.f32 %v475, %v508
        %v527 = vmul.f32 %v475, %v512
        %v528 = vmul.f32 %v475, %v516
        %v529 = vmul.f32 %v479, %v504
        %v530 = vmul.f32 %v479, %v508
        %v531 = vmul.f32 %v479, %v512
        %v532 = vmul.f32 %v479, %v516
        %v533 = vadd.f32 %v449, %v517
        %v534 = vadd.f32 %v450, %v518
        %v535 = vadd.f32 %v451, %v519
        %v536 = vadd.f32 %v452, %v520
        %v537 = vadd.f32 %v453, %v521
        %v538 = vadd.f32 %v454, %v522
        %v539 = vadd.f32 %v455, %v523
        %v540 = vadd.f32 %v456, %v524
        %v541 = vadd.f32 %v457, %v525
        %v542 = vadd.f32 %v458, %v526
        %v543 = vadd.f32 %v459, %v527
        %v544 = vadd.f32 %v460, %v528
        %v545 = vadd.f32 %v461, %v529
        %v546 = vadd.f32 %v462, %v530
        %v547 = vadd.f32 %v463, %v531
        %v548 = vadd.f32 %v464, %v532
        %v549 = vlaneseq
        %v550 = vand.u32 %v549, 127
        %v551 = vadd.s32 %v550, 128
        %v552 = vadd.s32 %v550, 256
        %v553 = vadd.s32 %v550, 384
        %v554 = vcvt.s32.f32 %v550
        %v555 = vcvt.s32.f32 %v551
        %v556 = vcvt.s32.f32 %v552
        %v557 = vcvt.s32.f32 %v553
        %559 = vset.pattern.permute.xlu0 0
        %560 = vperm.xlu0 %559, %v270
        %v561 = vpop.permute.xlu0 %560
        %v563 = vadd.f32 %v561, %v554
        %v564 = vadd.f32 %v561, %v555
        %v565 = vadd.f32 %v561, %v556
        %v566 = vadd.f32 %v561, %v557
        %v567 = vadd.f32 %v563, 0.5
        %v568 = vadd.f32 %v564, 0.5
        %v569 = vadd.f32 %v565, 0.5
        %v570 = vadd.f32 %v566, 0.5
        %v571 = vrot.slane %v561, 5
        %v573 = vmul.f32 %v567, %v571
        %v574 = vmul.f32 %v568, %v571
        %v575 = vmul.f32 %v569, %v571
        %v576 = vmul.f32 %v570, %v571
        %v577 = vfloor.f32 %v573
        %v578 = vfloor.f32 %v574
        %v579 = vfloor.f32 %v575
        %v580 = vfloor.f32 %v576
        %582 = vset.pattern.permute.xlu0 0
        %583 = vperm.xlu0 %582, %v269
        %v584 = vpop.permute.xlu0 %583
        %v585 = vrot.slane %v584, 4
        %v587 = vmul.f32 %v577, %v585
        %v588 = vmul.f32 %v578, %v585
        %v589 = vmul.f32 %v579, %v585
        %v590 = vmul.f32 %v580, %v585
        %v591 = vsub.f32 %v563, %v587
        %v592 = vsub.f32 %v564, %v588
        %v593 = vsub.f32 %v565, %v589
        %v594 = vsub.f32 %v566, %v590
        %v595 = vadd.f32 %v591, 0.5
        %v596 = vadd.f32 %v592, 0.5
        %v597 = vadd.f32 %v593, 0.5
        %v598 = vadd.f32 %v594, 0.5
        %v599 = vrot.slane %v561, 7
        %v601 = vmul.f32 %v595, %v599
        %v602 = vmul.f32 %v596, %v599
        %v603 = vmul.f32 %v597, %v599
        %v604 = vmul.f32 %v598, %v599
        %v605 = vfloor.f32 %v601
        %v606 = vfloor.f32 %v602
        %v607 = vfloor.f32 %v603
        %v608 = vfloor.f32 %v604
        %v609 = vrot.slane %v561, 6
        %v611 = vmul.f32 %v605, %v609
        %v612 = vmul.f32 %v606, %v609
        %v613 = vmul.f32 %v607, %v609
        %v614 = vmul.f32 %v608, %v609
        %v615 = vsub.f32 %v591, %v611
        %v616 = vsub.f32 %v592, %v612
        %v617 = vsub.f32 %v593, %v613
        %v618 = vsub.f32 %v594, %v614
        %v619 = vrot.slane %v561, 1
        %vm621 = vcmp.lt.f32.partialorder %v563, %v619
        %vm622 = vcmp.lt.f32.partialorder %v564, %v619
        %vm623 = vcmp.lt.f32.partialorder %v565, %v619
        %vm624 = vcmp.lt.f32.partialorder %v566, %v619
        %v625 = vxor.u32 %v533, 2147483648
        %v626 = vxor.u32 %v534, 2147483648
        %v627 = vxor.u32 %v535, 2147483648
        %v628 = vxor.u32 %v536, 2147483648
        %v629 = vxor.u32 %v537, 2147483648
        %v630 = vxor.u32 %v538, 2147483648
        %v631 = vxor.u32 %v539, 2147483648
        %v632 = vxor.u32 %v540, 2147483648
        %v633 = vmul.f32 %v625, 1.442695
        %v634 = vpow.pop %v633
        %v635 = vmul.f32 %v626, 1.442695
        %v636 = vpow.pop %v635
        %v637 = vmul.f32 %v627, 1.442695
        %v638 = vpow.pop %v637
        %v639 = vmul.f32 %v628, 1.442695
        %v640 = vpow.pop %v639
        %v641 = vmul.f32 %v629, 1.442695
        %v642 = vpow.pop %v641
        %v643 = vmul.f32 %v630, 1.442695
        %v644 = vpow.pop %v643
        %v645 = vmul.f32 %v631, 1.442695
        %v646 = vpow.pop %v645
        %v647 = vmul.f32 %v632, 1.442695
        %v648 = vpow.pop %v647
        %v649 = vadd.f32 %v634, 1.0
        %v650 = vadd.f32 %v636, 1.0
        %v651 = vadd.f32 %v638, 1.0
        %v652 = vadd.f32 %v640, 1.0
        %v653 = vadd.f32 %v642, 1.0
        %v654 = vadd.f32 %v644, 1.0
        %v655 = vadd.f32 %v646, 1.0
        %v656 = vadd.f32 %v648, 1.0
        %v657 = vrcp.pop %v649
        %v658 = vmul.f32 1.0, %v657
        %v659 = vrcp.pop %v650
        %v660 = vmul.f32 1.0, %v659
        %v661 = vrcp.pop %v651
        %v662 = vmul.f32 1.0, %v661
        %v663 = vrcp.pop %v652
        %v664 = vmul.f32 1.0, %v663
        %v665 = vrcp.pop %v653
        %v666 = vmul.f32 1.0, %v665
        %v667 = vrcp.pop %v654
        %v668 = vmul.f32 1.0, %v667
        %v669 = vrcp.pop %v655
        %v670 = vmul.f32 1.0, %v669
        %v671 = vrcp.pop %v656
        %v672 = vmul.f32 1.0, %v671
        %v673 = vlaneseq
        %v674 = vshrl.u32 %v673, 7
        %v675 = vsub.s32 3, %v674
        %v676 = vrot.slane %v615, %v675
        %v677 = vlaneseq
        %v678 = vshrl.u32 %v677, 7
        %v679 = vsub.s32 3, %v678
        %v680 = vrot.slane %v616, %v679
        %v681 = vlaneseq
        %v682 = vshrl.u32 %v681, 7
        %v683 = vsub.s32 3, %v682
        %v684 = vrot.slane %v617, %v683
        %v685 = vlaneseq
        %v686 = vshrl.u32 %v685, 7
        %v687 = vsub.s32 3, %v686
        %v688 = vrot.slane %v618, %v687
        %v689 = vadd.f32 %v676, %v658
        %v690 = vadd.f32 %v680, %v660
        %v691 = vadd.f32 %v684, %v662
        %v692 = vadd.f32 %v688, %v664
        %v693 = vrot.slane %v269, 6
        %s694 = vtos %v693
        %v695 = vstv %s694
        %v697 = vmul.f32 %v689, %v695
        %v698 = vmul.f32 %v690, %v695
        %v699 = vmul.f32 %v691, %v695
        %v700 = vmul.f32 %v692, %v695
        %v701 = vlaneseq
        %v702 = vshrl.u32 %v701, 7
        %v703 = vsub.s32 3, %v702
        %v704 = vrot.slane %v605, %v703
        %v705 = vlaneseq
        %v706 = vshrl.u32 %v705, 7
        %v707 = vsub.s32 3, %v706
        %v708 = vrot.slane %v606, %v707
        %v709 = vlaneseq
        %v710 = vshrl.u32 %v709, 7
        %v711 = vsub.s32 3, %v710
        %v712 = vrot.slane %v607, %v711
        %v713 = vlaneseq
        %v714 = vshrl.u32 %v713, 7
        %v715 = vsub.s32 3, %v714
        %v716 = vrot.slane %v608, %v715
        %v717 = vadd.f32 %v704, %v658
        %v718 = vadd.f32 %v708, %v660
        %v719 = vadd.f32 %v712, %v662
        %v720 = vadd.f32 %v716, %v664
        %v721 = vadd.f32 %v704, %v666
        %v722 = vadd.f32 %v708, %v668
        %v723 = vadd.f32 %v712, %v670
        %v724 = vadd.f32 %v716, %v672
        %v725 = vmul.f32 %v717, %v695
        %v726 = vmul.f32 %v718, %v695
        %v727 = vmul.f32 %v719, %v695
        %v728 = vmul.f32 %v720, %v695
        %v729 = vmul.f32 %v721, %v695
        %v730 = vmul.f32 %v722, %v695
        %v731 = vmul.f32 %v723, %v695
        %v732 = vmul.f32 %v724, %v695
        %v733 = vmin.f32 %v537, 30.0
        %v734 = vmin.f32 %v538, 30.0
        %v735 = vmin.f32 %v539, 30.0
        %v736 = vmin.f32 %v540, 30.0
        %v737 = vmul.f32 %v733, 1.442695
        %v738 = vpow.pop %v737
        %v739 = vmul.f32 %v734, 1.442695
        %v740 = vpow.pop %v739
        %v741 = vmul.f32 %v735, 1.442695
        %v742 = vpow.pop %v741
        %v743 = vmul.f32 %v736, 1.442695
        %v744 = vpow.pop %v743
        %v750 = vrot.slane %v738, 1
        %v751 = vrot.slane %v740, 1
        %v752 = vrot.slane %v742, 1
        %v753 = vrot.slane %v744, 1
        %v758 = vmul.f32 %v584, %v750
        %v759 = vmul.f32 %v584, %v751
        %v760 = vmul.f32 %v584, %v752
        %v761 = vmul.f32 %v584, %v753
        %vm770 = vcmask 1042432
        %v771 = vrot.slane %v537, 5
        %v772 = vrot.slane %v541, 5
        %v773 = vsel %vm770, %v771, %v772
        %v774 = vrot.slane %v538, 5
        %v775 = vrot.slane %v542, 5
        %v776 = vsel %vm770, %v774, %v775
        %v777 = vrot.slane %v539, 5
        %v778 = vrot.slane %v543, 5
        %v779 = vsel %vm770, %v777, %v778
        %v780 = vrot.slane %v540, 5
        %v781 = vrot.slane %v544, 5
        %v782 = vsel %vm770, %v780, %v781
        %vm787 = vcmp.gt.f32.partialorder %v541, %v773
        %vm788 = vcmp.gt.f32.partialorder %v542, %v776
        %vm789 = vcmp.gt.f32.partialorder %v543, %v779
        %vm790 = vcmp.gt.f32.partialorder %v544, %v782
        %v791 = vsel %vm787, %v541, %v773
        %v792 = vsel %vm788, %v542, %v776
        %v793 = vsel %vm789, %v543, %v779
        %v794 = vsel %vm790, %v544, %v782
        %v795 = vsel %vm787, 1.0, 0.0
        %v796 = vsel %vm788, 1.0, 0.0
        %v797 = vsel %vm789, 1.0, 0.0
        %v798 = vsel %vm790, 1.0, 0.0
        %v803 = vrot.slane %v791, 5
        %v804 = vrot.slane %v792, 5
        %v805 = vrot.slane %v793, 5
        %v806 = vrot.slane %v794, 5
        %vm811 = vcmp.gt.f32.partialorder %v541, %v803
        %vm812 = vcmp.gt.f32.partialorder %v542, %v804
        %vm813 = vcmp.gt.f32.partialorder %v543, %v805
        %vm814 = vcmp.gt.f32.partialorder %v544, %v806
        %v815 = vsel %vm811, %v541, %v803
        %v816 = vsel %vm812, %v542, %v804
        %v817 = vsel %vm813, %v543, %v805
        %v818 = vsel %vm814, %v544, %v806
        %v823 = vrot.slane %v795, 5
        %v824 = vrot.slane %v796, 5
        %v825 = vrot.slane %v797, 5
        %v826 = vrot.slane %v798, 5
        %v831 = vsel %vm811, 2.0, %v823
        %v832 = vsel %vm812, 2.0, %v824
        %v833 = vsel %vm813, 2.0, %v825
        %v834 = vsel %vm814, 2.0, %v826
        %v839 = vrot.slane %v815, 5
        %v840 = vrot.slane %v816, 5
        %v841 = vrot.slane %v817, 5
        %v842 = vrot.slane %v818, 5
        %vm847 = vcmp.gt.f32.partialorder %v545, %v839
        %vm848 = vcmp.gt.f32.partialorder %v546, %v840
        %vm849 = vcmp.gt.f32.partialorder %v547, %v841
        %vm850 = vcmp.gt.f32.partialorder %v548, %v842
        %v851 = vsel %vm847, %v545, %v839
        %v852 = vsel %vm848, %v546, %v840
        %v853 = vsel %vm849, %v547, %v841
        %v854 = vsel %vm850, %v548, %v842
        %v859 = vrot.slane %v831, 5
        %v860 = vrot.slane %v832, 5
        %v861 = vrot.slane %v833, 5
        %v862 = vrot.slane %v834, 5
        %v867 = vsel %vm847, 3.0, %v859
        %v868 = vsel %vm848, 3.0, %v860
        %v869 = vsel %vm849, 3.0, %v861
        %v870 = vsel %vm850, 3.0, %v862
        %v875 = vrot.slane %v851, 5
        %v876 = vrot.slane %v852, 5
        %v877 = vrot.slane %v853, 5
        %v878 = vrot.slane %v854, 5
        %vm883 = vcmp.gt.f32.partialorder %v545, %v875
        %vm884 = vcmp.gt.f32.partialorder %v546, %v876
        %vm885 = vcmp.gt.f32.partialorder %v547, %v877
        %vm886 = vcmp.gt.f32.partialorder %v548, %v878
        %v891 = vrot.slane %v867, 5
        %v892 = vrot.slane %v868, 5
        %v893 = vrot.slane %v869, 5
        %v894 = vrot.slane %v870, 5
        %v899 = vsel %vm883, 4.0, %v891
        %v900 = vsel %vm884, 4.0, %v892
        %v901 = vsel %vm885, 4.0, %v893
        %v902 = vsel %vm886, 4.0, %v894
        %vm903 = vcmp.gt.f32.partialorder %v658, 0.45
        %vm904 = vcmp.gt.f32.partialorder %v660, 0.45
        %vm905 = vcmp.gt.f32.partialorder %v662, 0.45
        %vm906 = vcmp.gt.f32.partialorder %v664, 0.45
        %v907 = vsel %vm621, 1, 0
        %v908 = vsel %vm622, 1, 0
        %v909 = vsel %vm623, 1, 0
        %v910 = vsel %vm624, 1, 0
        %v911 = vlaneseq
        %v912 = vshrl.u32 %v911, 7
        %v913 = vsub.s32 3, %v912
        %v914 = vrot.slane %v907, %v913
        %v915 = vlaneseq
        %v916 = vshrl.u32 %v915, 7
        %v917 = vsub.s32 3, %v916
        %v918 = vrot.slane %v908, %v917
        %v919 = vlaneseq
        %v920 = vshrl.u32 %v919, 7
        %v921 = vsub.s32 3, %v920
        %v922 = vrot.slane %v909, %v921
        %v923 = vlaneseq
        %v924 = vshrl.u32 %v923, 7
        %v925 = vsub.s32 3, %v924
        %v926 = vrot.slane %v910, %v925
        %vm927 = vcmp.eq.s32.totalorder %v914, 1
        %vm928 = vcmp.eq.s32.totalorder %v918, 1
        %vm929 = vcmp.eq.s32.totalorder %v922, 1
        %vm930 = vcmp.eq.s32.totalorder %v926, 1
        %vm931 = vmand %vm903, %vm927
        %vm932 = vmand %vm904, %vm928
        %vm933 = vmand %vm905, %vm929
        %vm934 = vmand %vm906, %vm930
        %v935 = vsel %vm931, 1, 0
        %v936 = vsel %vm932, 1, 0
        %v937 = vsel %vm933, 1, 0
        %v938 = vsel %vm934, 1, 0
        %v939 = vcvt.s32.f32 %v935
        %v940 = vcvt.s32.f32 %v936
        %v941 = vcvt.s32.f32 %v937
        %v942 = vcvt.s32.f32 %v938
        %v943 = vlaneseq
        %v944 = vshrl.u32 %v943, 7
        %v945 = vsub.s32 3, %v944
        %v946 = vrot.slane %v577, %v945
        %v947 = vlaneseq
        %v948 = vshrl.u32 %v947, 7
        %v949 = vsub.s32 3, %v948
        %v950 = vrot.slane %v578, %v949
        %v951 = vlaneseq
        %v952 = vshrl.u32 %v951, 7
        %v953 = vsub.s32 3, %v952
        %v954 = vrot.slane %v579, %v953
        %v955 = vlaneseq
        %v956 = vshrl.u32 %v955, 7
        %v957 = vsub.s32 3, %v956
        %v958 = vrot.slane %v580, %v957
        %v963 = vrot.slane %v658, 5
        %v964 = vrot.slane %v660, 5
        %v965 = vrot.slane %v662, 5
        %v966 = vrot.slane %v664, 5
        %v975 = vrot.slane %v697, 5
        %v976 = vrot.slane %v698, 5
        %v977 = vrot.slane %v699, 5
        %v978 = vrot.slane %v700, 5
        %v991 = vrot.slane %v725, 5
        %v992 = vrot.slane %v729, 5
        %v993 = vsel %vm770, %v991, %v992
        %v994 = vrot.slane %v726, 5
        %v995 = vrot.slane %v730, 5
        %v996 = vsel %vm770, %v994, %v995
        %v997 = vrot.slane %v727, 5
        %v998 = vrot.slane %v731, 5
        %v999 = vsel %vm770, %v997, %v998
        %v1000 = vrot.slane %v728, 5
        %v1001 = vrot.slane %v732, 5
        %v1002 = vsel %vm770, %v1000, %v1001
        %v1011 = vrot.slane %v758, 4
        %v1012 = vrot.slane %v759, 4
        %v1013 = vrot.slane %v760, 4
        %v1014 = vrot.slane %v761, 4
        %v1023 = vrot.slane %v899, 1
        %v1024 = vrot.slane %v900, 1
        %v1025 = vrot.slane %v901, 1
        %v1026 = vrot.slane %v902, 1
        %v1035 = vrot.slane %v939, 3
        %v1036 = vrot.slane %v940, 3
        %v1037 = vrot.slane %v941, 3
        %v1038 = vrot.slane %v942, 3
        %v1043 = vsel %vm770, %v946, %v963
        %v1044 = vsel %vm770, %v950, %v964
        %v1045 = vsel %vm770, %v954, %v965
        %v1046 = vsel %vm770, %v958, %v966
        %vm1047 = vcmask 1045504
        %v1048 = vsel %vm1047, %v1043, %v975
        %v1049 = vsel %vm1047, %v1044, %v976
        %v1050 = vsel %vm1047, %v1045, %v977
        %v1051 = vsel %vm1047, %v1046, %v978
        %vm1052 = vcmask 1040384
        %v1053 = vsel %vm1052, %v975, %v993
        %v1054 = vsel %vm1052, %v976, %v996
        %v1055 = vsel %vm1052, %v977, %v999
        %v1056 = vsel %vm1052, %v978, %v1002
        %vm1057 = vcmask 1043456
        %v1058 = vsel %vm1057, %v1053, %v1011
        %v1059 = vsel %vm1057, %v1054, %v1012
        %v1060 = vsel %vm1057, %v1055, %v1013
        %v1061 = vsel %vm1057, %v1056, %v1014
        %vm1062 = vcmask 1041408
        %v1063 = vsel %vm1062, %v1011, %v1023
        %v1064 = vsel %vm1062, %v1012, %v1024
        %v1065 = vsel %vm1062, %v1013, %v1025
        %v1066 = vsel %vm1062, %v1014, %v1026
        %vm1067 = vcmask 1044480
        %v1068 = vsel %vm1067, %v1063, %v1035
        %v1069 = vsel %vm1067, %v1064, %v1036
        %v1070 = vsel %vm1067, %v1065, %v1037
        %v1071 = vsel %vm1067, %v1066, %v1038
        %1072 = vst [vmem:[%s236] sm:$0xff] %v1048
        %1073 = vst [vmem:[%s236 + $0x8] sm:$0xff] %v1049
        %1074 = vst [vmem:[%s236 + $0x10] sm:$0xff] %v1050
        %1075 = vst [vmem:[%s236 + $0x18] sm:$0xff] %v1051
        %1076 = vst [vmem:[%s236 + $0x20] sm:$0xff] %v1058
        %1077 = vst [vmem:[%s236 + $0x28] sm:$0xff] %v1059
        %1078 = vst [vmem:[%s236 + $0x30] sm:$0xff] %v1060
        %1079 = vst [vmem:[%s236 + $0x38] sm:$0xff] %v1061
        %1080 = vst [vmem:[%s236 + $0x40] sm:$0xff] %v1068
        %1081 = vst [vmem:[%s236 + $0x48] sm:$0xff] %v1069
        %1082 = vst [vmem:[%s236 + $0x50] sm:$0xff] %v1070
        %1083 = vst [vmem:[%s236 + $0x58] sm:$0xff] %v1071
        %s1084 = sand.u32 %s130, 1
        %s1085 = scalar_lea.sflag [#allocation3], %s1084
        %s1086 = sand.u32 %s130, 1
        %s1087 = smul.addr %s1086, 96
        %s1088 = scalar_lea.vmem [#allocation2], %s1087
        // Predicated region
        $region37: #{detector_forward.1} parent=35 // pred_check
          %p1089 = pneg %p140
        $region38: #{detector_forward.1} parent=35 // pred_check_branch
          %1091 = sbr.rel (%p1089) target = $region40
        $region39: #{detector_forward.1} parent=35 // pred_region
          %s1092 = smul.u32 4, %s18
          %s1094 = ssub.s32 1536, 1536
          %1095 = vsyncadd %s1085, %s1094
          %s1096 = smul.addr %s1092, 128
          %s1097 = scalar_lea.hbm %s4, %s1096
          %s1098 = sshll.u32 %s1088, 4
          %s1099 = int_to_ptr.vmem [resolvable:$true] %s1098
          %1104 = dma.vmem_to_hbm [thread:$0]  %s1099, 1536, %s1097, %s1085, 512, 3072, 32
        $region40: #{detector_forward.1} parent=35 // pred_fallthru
          _
      $region36: #{detector_forward.1} parent=5 // pred_fallthru
        _
      %p1105 = scmp.le.s32.totalorder 2, %s13
      // Predicated region
      $region41: #{detector_forward.1} parent=5 // pred_check
        %p1106 = pneg %p1105
      $region42: #{detector_forward.1} parent=5 // pred_check_branch
        %1108 = sbr.rel (%p1106) target = $region44
      $region43: #{detector_forward.1} parent=5 // pred_region
        %s1109 = ssub.s32 %s13, 2
        // Predicated region
        $region45: #{detector_forward.1} parent=43 // pred_check
          %p1110 = pneg %p146
        $region46: #{detector_forward.1} parent=43 // pred_check_branch
          %1112 = sbr.rel (%p1110) target = $region48
        $region47: #{detector_forward.1} parent=43 // pred_region
          %s1113 = sand.u32 %s131, 1
          %s1114 = scalar_lea.sflag [#allocation3], %s1113
          %s1115 = sand.u32 %s131, 1
          %s1116 = smul.addr %s1115, 96
          %s1117 = scalar_lea.vmem [#allocation2], %s1116
          %1118 = dma.done %s1114, 1536
        $region48: #{detector_forward.1} parent=43 // pred_fallthru
          _
      $region44: #{detector_forward.1} parent=5 // pred_fallthru
        _
    $region6: #{detector_forward.1} parent=1 // loop_footer
      %s17 = sadd.s32 1, %s13
    $region7: #{detector_forward.1} parent=1 // loop_footer_branch
      %12 = sbr.rel target = $region3
    $region8: #{detector_forward.1} parent=1 // loop_exit
      _
    %1119 = vsyncpa [#allocation3], 1
    %s1120 = scalar_lea.sflag [#allocation3], 1
    %1121 = vsyncpa %s1120, 1

</llo_original>
